<compile_context>
chip_gen: v7x
topology: tpu7x:2x2x1
jax: 0.10.0
libtpu: 0.0.40
codegen_flags: <defaults>
</compile_context>

<pallas_src>
import math

import jax
import jax.numpy as jnp
from jax import lax
from jax.experimental import pallas as pl
from jax.experimental.pallas import tpu as pltpu

LANE = 128
SUBLANE = 8
VMEM_LIMIT_BYTES = 48 * 1024 * 1024  # > default scoped (16/32 MiB), < v7x physical 64 MiB


# ----------------------------------------------------------------------------- helpers
def _round_up(x, m):
    return (x + m - 1) // m * m


def _full_spec(shape):
    # single-block BlockSpec covering the whole array (block dims == full array dims).
    return pl.BlockSpec(shape, lambda: (0,) * len(shape))


def _log_softmax_rows(x):
    m = jnp.max(x, axis=1, keepdims=True)
    s = x - m
    return s - jnp.log(jnp.sum(jnp.exp(s), axis=1, keepdims=True))


def between_index(n_inputs, i, j):
    return i * n_inputs - i * (i + 1) // 2 + (j - i - 1)


# ----------------------------------------------------------------------------- kernel 1: fused GCN stacks
def make_gcn_stack_kernel(n_inputs, n_layers, nclasses, compute_dtype):
    """All GraphConvolution layers (+ log_softmax heads) of every modality, fused.

    ref order: [adj_i, x_i, (w, b) * L_i] per modality, then feat_i outputs,
    then class_i outputs (only for nclass > 1 modalities).
    """

    def mm(a, b):
        return jnp.dot(a.astype(compute_dtype), b.astype(compute_dtype),
                       preferred_element_type=jnp.float32)

    def gcn_layer(adj, h, w, b):
        f_in, f_out = w.shape
        if f_in <= f_out:
            # (adj @ h) @ W : N^2 contraction over the narrower f_in
            return mm(mm(adj, h), w) + b
        # adj @ (h @ W) : N^2 contraction over the narrower f_out
        return mm(adj, mm(h, w)) + b

    def kernel(*refs):
        pos = 0
        adj_refs, x_refs, wb_refs = [], [], []
        for i in range(n_inputs):
            adj_refs.append(refs[pos]); pos += 1
            x_refs.append(refs[pos]); pos += 1
            layers = []
            for _ in range(n_layers[i]):
                layers.append((refs[pos], refs[pos + 1])); pos += 2
            wb_refs.append(layers)
        feat_refs = [refs[pos + i] for i in range(n_inputs)]
        pos += n_inputs
        class_refs = []
        for i in range(n_inputs):
            if nclasses[i] > 1:
                class_refs.append(refs[pos]); pos += 1
            else:
                class_refs.append(None)

        for i in range(n_inputs):
            adj = adj_refs[i][...]
            h = x_refs[i][...]
            L = n_layers[i]
            end = L - 1 if nclasses[i] > 1 else L
            for l in range(end):
                w_ref, b_ref = wb_refs[i][l]
                # relu; F.dropout(training=False) == identity
                h = jnp.maximum(gcn_layer(adj, h, w_ref[...], b_ref[...]), 0.0)
            feat_refs[i][...] = h  # features leave via explicit VMEM output buffer
            if nclasses[i] > 1:
                w_ref, b_ref = wb_refs[i][L - 1]
                logits = gcn_layer(adj, h, w_ref[...], b_ref[...])
                class_refs[i][...] = _log_softmax_rows(logits)

    return kernel


# ----------------------------------------------------------------------------- kernel 2: Gram + cross layers (row-tiled)
def make_gram_cross_kernel(n_inputs, tm, compute_dtype):
    def mm_abT(a, b):
        # A @ B^T via dot_general contracting the last dims (no XLU transpose of B).
        return lax.dot_general(a.astype(compute_dtype), b.astype(compute_dtype),
                               (((1,), (1,)), ((), ())),
                               preferred_element_type=jnp.float32)

    def kernel(cross_bias_ref, *refs):
        feat_refs = refs[:n_inputs]               # (N_pad, Fp) full-block residents
        gram_refs = refs[n_inputs:2 * n_inputs]   # (tm, N_pad) row tiles
        cross_refs = refs[2 * n_inputs:]          # (tm, N_pad) row tiles
        r0 = pl.multiple_of(pl.program_id(0) * tm, tm)
        rows = [f[pl.ds(r0, tm), :] for f in feat_refs]
        for i in range(n_inputs):
            gram_refs[i][...] = mm_abT(rows[i], feat_refs[i][...])
        p = 0
        for i in range(n_inputs):
            for j in range(i + 1, n_inputs):
                cross_refs[p][...] = mm_abT(rows[i], feat_refs[j][...]) + cross_bias_ref[p]
                p += 1

    return kernel


# ----------------------------------------------------------------------------- wrapper
def _pad_gcn_params(gcn_params, nclasses):
    """Zero-pad hidden widths to multiples of 128 lanes (numerically exact).
    Input feature dims and the classifier width stay unpadded."""
    padded = []
    for i, (ws, bs) in enumerate(gcn_params):
        L = len(ws)
        pws, pbs = [], []
        in_dim = int(ws[0].shape[0])
        for l, (w, b) in enumerate(zip(ws, bs)):
            is_cls = (nclasses[i] > 1 and l == L - 1)
            out_dim = int(w.shape[1]) if is_cls else _round_up(int(w.shape[1]), LANE)
            pw = jnp.zeros((in_dim, out_dim), jnp.float32)
            pw = pw.at[: w.shape[0], : w.shape[1]].set(jnp.asarray(w, jnp.float32))
            pb = jnp.zeros((1, out_dim), jnp.float32)
            pb = pb.at[0, : w.shape[1]].set(jnp.asarray(b, jnp.float32).reshape(-1))
            pws.append(pw)
            pbs.append(pb)
            in_dim = out_dim
        padded.append((pws, pbs))
    return padded


def _pick_row_tile(n_max):
    # Conservative default that fits v7x's 64 MiB VMEM double-buffered;
    # v5e/v6e (128 MiB) could take 512-1024 rows at large N.
    if n_max >= 2048:
        return 256
    if n_max >= 256:
        return 128
    return SUBLANE  # toy sizes: still exercises the pipelined, megacore-parallel grid


def ccn_forward(xs, adjs, gcn_params, cross_biases, nclasses, *,
                row_tile=None, compute_dtype=jnp.float32):
    """CCN forward. Returns (classes_labels, bet_layers_output, in_layers_output)."""
    n_inputs = len(xs)
    n_layers = tuple(len(gcn_params[i][0]) for i in range(n_inputs))
    n_pairs = n_inputs * (n_inputs - 1) // 2
    ns = [int(adjs[i].shape[0]) for i in range(n_inputs)]

    padded_params = _pad_gcn_params(gcn_params, nclasses)

    # ------------------ kernel 1: fused GCN stacks (features + classifiers) ------
    adj_in = [jnp.asarray(a, compute_dtype) for a in adjs]  # bf16 halves adj HBM bytes
    k1_inputs, k1_specs = [], []
    flops1 = 0
    for i in range(n_inputs):
        pws, pbs = padded_params[i]
        k1_inputs.append(adj_in[i]); k1_specs.append(_full_spec(adj_in[i].shape))
        xi = jnp.asarray(xs[i], jnp.float32)
        k1_inputs.append(xi); k1_specs.append(_full_spec(xi.shape))
        for w, b in zip(pws, pbs):
            k1_inputs.append(w); k1_specs.append(_full_spec(w.shape))
            k1_inputs.append(b); k1_specs.append(_full_spec(b.shape))
            fi, fo = int(w.shape[0]), int(w.shape[1])
            flops1 += 2 * ns[i] * ns[i] * min(fi, fo) + 2 * ns[i] * fi * fo

    feat_dims, k1_out_shapes, k1_out_specs = [], [], []
    for i in range(n_inputs):
        pws, _ = padded_params[i]
        end = n_layers[i] - 1 if nclasses[i] > 1 else n_layers[i]
        fp = int(pws[end - 1].shape[1])
        feat_dims.append(fp)
        shp = (ns[i], fp)
        k1_out_shapes.append(jax.ShapeDtypeStruct(shp, jnp.float32))
        k1_out_specs.append(_full_spec(shp))
    class_out_idx = []
    trans1 = 0
    for i in range(n_inputs):
        if nclasses[i] > 1:
            class_out_idx.append(len(k1_out_shapes))
            shp = (ns[i], nclasses[i])
            k1_out_shapes.append(jax.ShapeDtypeStruct(shp, jnp.float32))
            k1_out_specs.append(_full_spec(shp))
            trans1 += ns[i] * nclasses[i] + ns[i]  # exp + log per classifier row
        else:
            class_out_idx.append(None)

    bytes1 = (sum(int(a.size) * int(a.dtype.itemsize) for a in k1_inputs)
              + sum(4 * int(math.prod(s.shape)) for s in k1_out_shapes))

    k1_outs = pl.pallas_call(
        make_gcn_stack_kernel(n_inputs, n_layers, tuple(nclasses), compute_dtype),
        out_shape=tuple(k1_out_shapes),
        in_specs=k1_specs,
        out_specs=tuple(k1_out_specs),
        compiler_params=pltpu.CompilerParams(vmem_limit_bytes=VMEM_LIMIT_BYTES),
        cost_estimate=pl.CostEstimate(flops=flops1, transcendentals=trans1,
                                      bytes_accessed=bytes1),
    )(*k1_inputs)
    feats = [k1_outs[i] for i in range(n_inputs)]
    classes_labels = [k1_outs[class_out_idx[i]] if class_out_idx[i] is not None else None
                      for i in range(n_inputs)]

    # ------------------ kernel 2: Gram + cross layers, row-tiled "parallel" grid --
    tm = row_tile if row_tile is not None else _pick_row_tile(max(ns))
    n_pad = _round_up(max(ns), tm)
    grid = (n_pad // tm,)

    feats_p = []
    for i in range(n_inputs):
        f = feats[i]
        if ns[i] != n_pad:
            f = jnp.pad(f, ((0, n_pad - ns[i]), (0, 0)))  # zero rows: exact after slicing
        feats_p.append(f)

    cb = jnp.asarray(list(cross_biases) if n_pairs > 0 else [0.0],
                     jnp.float32).reshape(max(n_pairs, 1))

    k2_inputs = [cb] + feats_p
    k2_specs = [pl.BlockSpec(memory_space=pltpu.MemorySpace.SMEM)]  # scalar biases
    for i in range(n_inputs):
        k2_specs.append(pl.BlockSpec((n_pad, feat_dims[i]), lambda r: (0, 0)))

    k2_out_shapes, k2_out_specs = [], []
    for _ in range(n_inputs + n_pairs):
        k2_out_shapes.append(jax.ShapeDtypeStruct((n_pad, n_pad), jnp.float32))
        k2_out_specs.append(pl.BlockSpec((tm, n_pad), lambda r: (r, 0)))

    flops2 = sum(2 * n_pad * n_pad * d for d in feat_dims)
    for i in range(n_inputs):
        for j in range(i + 1, n_inputs):
            flops2 += 2 * n_pad * n_pad * feat_dims[i]
    bytes2 = 4 * (sum(n_pad * d for d in feat_dims)
                  + (n_inputs + n_pairs) * n_pad * n_pad + int(cb.size))

    k2_outs = pl.pallas_call(
        make_gram_cross_kernel(n_inputs, tm, compute_dtype),
        grid=grid,
        out_shape=tuple(k2_out_shapes),
        in_specs=k2_specs,
        out_specs=tuple(k2_out_specs),
        compiler_params=pltpu.CompilerParams(
            dimension_semantics=("parallel",),  # shards row tiles across v7x's 2 TCs
            vmem_limit_bytes=VMEM_LIMIT_BYTES),
        cost_estimate=pl.CostEstimate(flops=flops2, transcendentals=0,
                                      bytes_accessed=bytes2),
    )(*k2_inputs)

    in_layers_output = []
    for i in range(n_inputs):
        g = k2_outs[i]
        in_layers_output.append(g if ns[i] == n_pad else g[: ns[i], : ns[i]])
    bet_layers_output = []
    p = 0
    for i in range(n_inputs):
        for j in range(i + 1, n_inputs):
            c = k2_outs[n_inputs + p]
            if ns[i] != n_pad or ns[j] != n_pad:
                c = c[: ns[i], : ns[j]]
            bet_layers_output.append(c)
            p += 1

    return classes_labels, bet_layers_output, in_layers_output


# ----------------------------------------------------------------------------- pure-JAX reference (literal PyTorch op order)
def ccn_reference(xs, adjs, gcn_params, cross_biases, nclasses):
    n_inputs = len(xs)
    feats, classes = [], []
    for i in range(n_inputs):
        ws, bs = gcn_params[i]
        L = len(ws)
        h = jnp.asarray(xs[i], jnp.float32)
        end = L - 1 if nclasses[i] > 1 else L
        for l in range(end):
            h = jnp.maximum(adjs[i] @ (h @ ws[l]) + bs[l].reshape(1, -1), 0.0)
        feats.append(h)
        if nclasses[i] > 1:
            logits = adjs[i] @ (h @ ws[L - 1]) + bs[L - 1].reshape(1, -1)
            classes.append(jax.nn.log_softmax(logits, axis=1))
        else:
            classes.append(None)
    in_out = [f @ f.T for f in feats]
    bet = []
    p = 0
    for i in range(n_inputs):
        for j in range(i + 1, n_inputs):
            bet.append(feats[i] @ feats[j].T + cross_biases[p])
            p += 1
    return classes, bet, in_out


# ----------------------------------------------------------------------------- setup
def init_gcn_params(key, nfeat, nhid, nclass):
    dims = [nfeat] + list(nhid) + ([nclass] if nclass > 1 else [])
    ws, bs = [], []
    for d_in, d_out in zip(dims[:-1], dims[1:]):
        key, kw, kb = jax.random.split(key, 3)
        scale = 1.0 / jnp.sqrt(jnp.float32(d_in))
        ws.append(jax.random.uniform(kw, (d_in, d_out), jnp.float32, -scale, scale))
        bs.append(jax.random.uniform(kb, (d_out,), jnp.float32, -scale, scale))
    return (ws, bs), key


if __name__ == "__main__":
    key = jax.random.PRNGKey(0)

    n_inputs = 2
    n_nodes = [16, 16]
    inputs_nfeat = [8, 6]
    inputs_nhid = [[32, 16], [24, 16]]  # last hidden dims must match for the cross layers
    inputs_nclass = [3, 1]

    gcn_params = []
    for i in range(n_inputs):
        params, key = init_gcn_params(key, inputs_nfeat[i], inputs_nhid[i], inputs_nclass[i])
        gcn_params.append(params)
    n_pairs = n_inputs * (n_inputs - 1) // 2
    cross_biases = [0.1 * (p + 1) for p in range(n_pairs)]

    xs, adjs = [], []
    for i in range(n_inputs):
        key, kx, ka = jax.random.split(key, 3)
        xs.append(jax.random.normal(kx, (n_nodes[i], inputs_nfeat[i]), jnp.float32))
        a = jax.random.uniform(ka, (n_nodes[i], n_nodes[i]), jnp.float32)
        a = 0.5 * (a + a.T) + jnp.eye(n_nodes[i], dtype=jnp.float32)
        a = a / jnp.sum(a, axis=1, keepdims=True)  # row-normalized dense adjacency
        adjs.append(a)

    classes_labels, bet_out, in_out = ccn_forward(
        xs, adjs, gcn_params, cross_biases, inputs_nclass)
    for arr in ([c for c in classes_labels if c is not None] + bet_out + in_out):
        jax.block_until_ready(arr)

    # shape / structure checks
    assert classes_labels[0].shape == (n_nodes[0], inputs_nclass[0])
    assert classes_labels[1] is None
    assert in_out[0].shape == (n_nodes[0], n_nodes[0])
    assert in_out[1].shape == (n_nodes[1], n_nodes[1])
    assert bet_out[0].shape == (n_nodes[0], n_nodes[1])

    # pure-JAX reference check; tolerance covers TPU default matmul precision
    # (bf16 multiply passes, f32 accumulate) and the in-kernel association reorder.
    ref_classes, ref_bet, ref_in = ccn_reference(
        xs, adjs, gcn_params, cross_biases, inputs_nclass)
    tol = dict(rtol=5e-2, atol=5e-2)
    assert bool(jnp.allclose(classes_labels[0], ref_classes[0], **tol))
    for a, b in zip(in_out, ref_in):
        assert bool(jnp.allclose(a, b, **tol))
    for a, b in zip(bet_out, ref_bet):
        assert bool(jnp.allclose(a, b, **tol))
    assert bool(jnp.allclose(jnp.sum(jnp.exp(classes_labels[0]), axis=1), 1.0, atol=1e-3))

    # bf16-MXU path (halved adj HBM stream, f32 accumulation) — sanity only.
    cl_b, bet_b, in_b = ccn_forward(
        xs, adjs, gcn_params, cross_biases, inputs_nclass, compute_dtype=jnp.bfloat16)
    for arr in ([c for c in cl_b if c is not None] + bet_b + in_b):
        jax.block_until_ready(arr)
        assert bool(jnp.all(jnp.isfinite(arr)))

    print("KERNEL_OK")
</pallas_src>

<mosaic_0001>
module attributes {stable_mosaic.version = 11 : i64} {
  func.func @kernel(%arg0: memref<16x16xf32, #tpu.memory_space<vmem>>, %arg1: memref<16x8xf32, #tpu.memory_space<vmem>>, %arg2: memref<8x128xf32, #tpu.memory_space<vmem>>, %arg3: memref<1x128xf32, #tpu.memory_space<vmem>>, %arg4: memref<128x128xf32, #tpu.memory_space<vmem>>, %arg5: memref<1x128xf32, #tpu.memory_space<vmem>>, %arg6: memref<128x3xf32, #tpu.memory_space<vmem>>, %arg7: memref<1x3xf32, #tpu.memory_space<vmem>>, %arg8: memref<16x16xf32, #tpu.memory_space<vmem>>, %arg9: memref<16x6xf32, #tpu.memory_space<vmem>>, %arg10: memref<6x128xf32, #tpu.memory_space<vmem>>, %arg11: memref<1x128xf32, #tpu.memory_space<vmem>>, %arg12: memref<128x128xf32, #tpu.memory_space<vmem>>, %arg13: memref<1x128xf32, #tpu.memory_space<vmem>>, %arg14: memref<16x128xf32, #tpu.memory_space<vmem>>, %arg15: memref<16x128xf32, #tpu.memory_space<vmem>>, %arg16: memref<16x3xf32, #tpu.memory_space<vmem>>) attributes {dimension_semantics = [], scalar_prefetch = 0 : i64, scratch_operands = 0 : i64, tpu.core_type = #tpu.core_type<tc>} {
    %c0 = arith.constant 0 : index
    %c0_0 = arith.constant 0 : index
    %0 = vector.load %arg0[%c0, %c0_0] : memref<16x16xf32, #tpu.memory_space<vmem>>, vector<16x16xf32>
    %c0_1 = arith.constant 0 : index
    %c0_2 = arith.constant 0 : index
    %1 = vector.load %arg1[%c0_1, %c0_2] : memref<16x8xf32, #tpu.memory_space<vmem>>, vector<16x8xf32>
    %c0_3 = arith.constant 0 : index
    %c0_4 = arith.constant 0 : index
    %2 = vector.load %arg2[%c0_3, %c0_4] : memref<8x128xf32, #tpu.memory_space<vmem>>, vector<8x128xf32>
    %c0_5 = arith.constant 0 : index
    %c0_6 = arith.constant 0 : index
    %3 = vector.load %arg3[%c0_5, %c0_6] : memref<1x128xf32, #tpu.memory_space<vmem>>, vector<1x128xf32>
    %cst = arith.constant dense<0.000000e+00> : vector<16x8xf32>
    %4 = tpu.matmul %0, %1, %cst {dimension_numbers = #tpu.dot_dimension_numbers<[1], [0], [0], [1], [0, 0, 1, 1], [], []>} : vector<16x16xf32>, vector<16x8xf32>, vector<16x8xf32> -> vector<16x8xf32>
    %cst_7 = arith.constant dense<0.000000e+00> : vector<16x128xf32>
    %5 = tpu.matmul %4, %2, %cst_7 {dimension_numbers = #tpu.dot_dimension_numbers<[1], [0], [0], [1], [0, 0, 1, 1], [], []>} : vector<16x8xf32>, vector<8x128xf32>, vector<16x128xf32> -> vector<16x128xf32>
    %6 = vector.broadcast %3 : vector<1x128xf32> to vector<16x128xf32>
    %7 = arith.addf %5, %6 : vector<16x128xf32>
    %cst_8 = arith.constant 0.000000e+00 : f32
    %8 = vector.broadcast %cst_8 : f32 to vector<16x128xf32>
    %9 = arith.maximumf %7, %8 : vector<16x128xf32>
    %c0_9 = arith.constant 0 : index
    %c0_10 = arith.constant 0 : index
    %10 = vector.load %arg4[%c0_9, %c0_10] : memref<128x128xf32, #tpu.memory_space<vmem>>, vector<128x128xf32>
    %c0_11 = arith.constant 0 : index
    %c0_12 = arith.constant 0 : index
    %11 = vector.load %arg5[%c0_11, %c0_12] : memref<1x128xf32, #tpu.memory_space<vmem>>, vector<1x128xf32>
    %cst_13 = arith.constant dense<0.000000e+00> : vector<16x128xf32>
    %12 = tpu.matmul %0, %9, %cst_13 {dimension_numbers = #tpu.dot_dimension_numbers<[1], [0], [0], [1], [0, 0, 1, 1], [], []>} : vector<16x16xf32>, vector<16x128xf32>, vector<16x128xf32> -> vector<16x128xf32>
    %cst_14 = arith.constant dense<0.000000e+00> : vector<16x128xf32>
    %13 = tpu.matmul %12, %10, %cst_14 {dimension_numbers = #tpu.dot_dimension_numbers<[1], [0], [0], [1], [0, 0, 1, 1], [], []>} : vector<16x128xf32>, vector<128x128xf32>, vector<16x128xf32> -> vector<16x128xf32>
    %14 = vector.broadcast %11 : vector<1x128xf32> to vector<16x128xf32>
    %15 = arith.addf %13, %14 : vector<16x128xf32>
    %cst_15 = arith.constant 0.000000e+00 : f32
    %16 = vector.broadcast %cst_15 : f32 to vector<16x128xf32>
    %17 = arith.maximumf %15, %16 : vector<16x128xf32>
    %c0_16 = arith.constant 0 : index
    %c0_17 = arith.constant 0 : index
    %18 = vector.load %arg14[%c0_16, %c0_17] : memref<16x128xf32, #tpu.memory_space<vmem>>, vector<16x128xf32>
    tpu.vector_store %arg14[%c0_16, %c0_17], %17 {strides = array<i32>} : memref<16x128xf32, #tpu.memory_space<vmem>>, vector<16x128xf32>,
    %c0_18 = arith.constant 0 : index
    %c0_19 = arith.constant 0 : index
    %19 = vector.load %arg6[%c0_18, %c0_19] : memref<128x3xf32, #tpu.memory_space<vmem>>, vector<128x3xf32>
    %c0_20 = arith.constant 0 : index
    %c0_21 = arith.constant 0 : index
    %20 = vector.load %arg7[%c0_20, %c0_21] : memref<1x3xf32, #tpu.memory_space<vmem>>, vector<1x3xf32>
    %cst_22 = arith.constant dense<0.000000e+00> : vector<16x3xf32>
    %21 = tpu.matmul %17, %19, %cst_22 {dimension_numbers = #tpu.dot_dimension_numbers<[1], [0], [0], [1], [0, 0, 1, 1], [], []>} : vector<16x128xf32>, vector<128x3xf32>, vector<16x3xf32> -> vector<16x3xf32>
    %cst_23 = arith.constant dense<0.000000e+00> : vector<16x3xf32>
    %22 = tpu.matmul %0, %21, %cst_23 {dimension_numbers = #tpu.dot_dimension_numbers<[1], [0], [0], [1], [0, 0, 1, 1], [], []>} : vector<16x16xf32>, vector<16x3xf32>, vector<16x3xf32> -> vector<16x3xf32>
    %23 = vector.broadcast %20 : vector<1x3xf32> to vector<16x3xf32>
    %24 = arith.addf %22, %23 : vector<16x3xf32>
    %cst_24 = arith.constant dense<0xFF800000> : vector<16xf32>
    %25 = vector.multi_reduction <maximumf>, %24, %cst_24 [1] : vector<16x3xf32> to vector<16xf32>
    %26 = vector.shape_cast %25 : vector<16xf32> to vector<16x1xf32>
    %27 = vector.broadcast %26 : vector<16x1xf32> to vector<16x3xf32>
    %28 = arith.subf %24, %27 : vector<16x3xf32>
    %29 = math.exp %28 : vector<16x3xf32>
    %cst_25 = arith.constant dense<0.000000e+00> : vector<16xf32>
    %30 = vector.multi_reduction <add>, %29, %cst_25 [1] : vector<16x3xf32> to vector<16xf32>
    %31 = vector.shape_cast %30 : vector<16xf32> to vector<16x1xf32>
    %32 = math.log %31 : vector<16x1xf32>
    %33 = vector.broadcast %32 : vector<16x1xf32> to vector<16x3xf32>
    %34 = arith.subf %28, %33 : vector<16x3xf32>
    %c0_26 = arith.constant 0 : index
    %c0_27 = arith.constant 0 : index
    %35 = vector.load %arg16[%c0_26, %c0_27] : memref<16x3xf32, #tpu.memory_space<vmem>>, vector<16x3xf32>
    tpu.vector_store %arg16[%c0_26, %c0_27], %34 {strides = array<i32>} : memref<16x3xf32, #tpu.memory_space<vmem>>, vector<16x3xf32>,
    %c0_28 = arith.constant 0 : index
    %c0_29 = arith.constant 0 : index
    %36 = vector.load %arg8[%c0_28, %c0_29] : memref<16x16xf32, #tpu.memory_space<vmem>>, vector<16x16xf32>
    %c0_30 = arith.constant 0 : index
    %c0_31 = arith.constant 0 : index
    %37 = vector.load %arg9[%c0_30, %c0_31] : memref<16x6xf32, #tpu.memory_space<vmem>>, vector<16x6xf32>
    %c0_32 = arith.constant 0 : index
    %c0_33 = arith.constant 0 : index
    %38 = vector.load %arg10[%c0_32, %c0_33] : memref<6x128xf32, #tpu.memory_space<vmem>>, vector<6x128xf32>
    %c0_34 = arith.constant 0 : index
    %c0_35 = arith.constant 0 : index
    %39 = vector.load %arg11[%c0_34, %c0_35] : memref<1x128xf32, #tpu.memory_space<vmem>>, vector<1x128xf32>
    %cst_36 = arith.constant dense<0.000000e+00> : vector<16x6xf32>
    %40 = tpu.matmul %36, %37, %cst_36 {dimension_numbers = #tpu.dot_dimension_numbers<[1], [0], [0], [1], [0, 0, 1, 1], [], []>} : vector<16x16xf32>, vector<16x6xf32>, vector<16x6xf32> -> vector<16x6xf32>
    %cst_37 = arith.constant dense<0.000000e+00> : vector<16x128xf32>
    %41 = tpu.matmul %40, %38, %cst_37 {dimension_numbers = #tpu.dot_dimension_numbers<[1], [0], [0], [1], [0, 0, 1, 1], [], []>} : vector<16x6xf32>, vector<6x128xf32>, vector<16x128xf32> -> vector<16x128xf32>
    %42 = vector.broadcast %39 : vector<1x128xf32> to vector<16x128xf32>
    %43 = arith.addf %41, %42 : vector<16x128xf32>
    %cst_38 = arith.constant 0.000000e+00 : f32
    %44 = vector.broadcast %cst_38 : f32 to vector<16x128xf32>
    %45 = arith.maximumf %43, %44 : vector<16x128xf32>
    %c0_39 = arith.constant 0 : index
    %c0_40 = arith.constant 0 : index
    %46 = vector.load %arg12[%c0_39, %c0_40] : memref<128x128xf32, #tpu.memory_space<vmem>>, vector<128x128xf32>
    %c0_41 = arith.constant 0 : index
    %c0_42 = arith.constant 0 : index
    %47 = vector.load %arg13[%c0_41, %c0_42] : memref<1x128xf32, #tpu.memory_space<vmem>>, vector<1x128xf32>
    %cst_43 = arith.constant dense<0.000000e+00> : vector<16x128xf32>
    %48 = tpu.matmul %36, %45, %cst_43 {dimension_numbers = #tpu.dot_dimension_numbers<[1], [0], [0], [1], [0, 0, 1, 1], [], []>} : vector<16x16xf32>, vector<16x128xf32>, vector<16x128xf32> -> vector<16x128xf32>
    %cst_44 = arith.constant dense<0.000000e+00> : vector<16x128xf32>
    %49 = tpu.matmul %48, %46, %cst_44 {dimension_numbers = #tpu.dot_dimension_numbers<[1], [0], [0], [1], [0, 0, 1, 1], [], []>} : vector<16x128xf32>, vector<128x128xf32>, vector<16x128xf32> -> vector<16x128xf32>
    %50 = vector.broadcast %47 : vector<1x128xf32> to vector<16x128xf32>
    %51 = arith.addf %49, %50 : vector<16x128xf32>
    %cst_45 = arith.constant 0.000000e+00 : f32
    %52 = vector.broadcast %cst_45 : f32 to vector<16x128xf32>
    %53 = arith.maximumf %51, %52 : vector<16x128xf32>
    %c0_46 = arith.constant 0 : index
    %c0_47 = arith.constant 0 : index
    %54 = vector.load %arg15[%c0_46, %c0_47] : memref<16x128xf32, #tpu.memory_space<vmem>>, vector<16x128xf32>
    tpu.vector_store %arg15[%c0_46, %c0_47], %53 {strides = array<i32>} : memref<16x128xf32, #tpu.memory_space<vmem>>, vector<16x128xf32>,
    return
  }
}

</mosaic_0001>

<llo_original>
// kernel: tpu_custom_call.1
$region0: #{tpu_custom_call.1}
  #allocation0 [shape = 'u32[]', space=smem, size = 0x4, offset = 0x4, fixed_abs, tag = 'smem constant byte address 0x4 - core index']
  #allocation1 [shape = 'u32[144,128]{1,0:T(1,128)}', space=vmem, size = 0x12000, scoped, tag = 'internal scratch']
  %s0 = inlined_call_operand.vmem [shape: f32[16,16], index: 0, kind: input, shape index: {}]
  %s1 = inlined_call_operand.vmem [shape: f32[16,8], index: 1, kind: input, shape index: {}]
  %s2 = inlined_call_operand.vmem [shape: f32[8,128], index: 2, kind: input, shape index: {}]
  %s3 = inlined_call_operand.vmem [shape: f32[1,128], index: 3, kind: input, shape index: {}]
  %s4 = inlined_call_operand.vmem [shape: f32[128,128], index: 4, kind: input, shape index: {}]
  %s5 = inlined_call_operand.vmem [shape: f32[1,128], index: 5, kind: input, shape index: {}]
  %s6 = inlined_call_operand.vmem [shape: f32[128,3], index: 6, kind: input, shape index: {}]
  %s7 = inlined_call_operand.vmem [shape: f32[1,3], index: 7, kind: input, shape index: {}]
  %s8 = inlined_call_operand.vmem [shape: f32[16,16], index: 8, kind: input, shape index: {}]
  %s9 = inlined_call_operand.vmem [shape: f32[16,6], index: 9, kind: input, shape index: {}]
  %s10 = inlined_call_operand.vmem [shape: f32[6,128], index: 10, kind: input, shape index: {}]
  %s11 = inlined_call_operand.vmem [shape: f32[1,128], index: 11, kind: input, shape index: {}]
  %s12 = inlined_call_operand.hbm [shape: f32[128,128], index: 12, kind: input, shape index: {}]
  %s13 = inlined_call_operand.vmem [shape: f32[1,128], index: 13, kind: input, shape index: {}]
  %s14 = inlined_call_operand.hbm [shape: f32[16,128], index: 14, kind: output, shape index: {0}]
  %s15 = inlined_call_operand.hbm [shape: f32[16,128], index: 15, kind: output, shape index: {1}]
  %s16 = inlined_call_operand.vmem [shape: f32[16,3], index: 16, kind: output, shape index: {2}]
  %17 = xla_tuple %s14, %s15, %s16
  %s18 = sld [smem:[#allocation0]]
  $region86: #{tpu_custom_call.1} parent=0
    _
  %s20 = ssub.s32 1, %s18
  %s21 = scalar_select 0, %s20, %s18
  $region1: #{tpu_custom_call.1} parent=0
    #allocation2 [shape = 'u8[65536]{0}', space=vmem, size = 0x10000, scoped, tag = 'input window, operand 12, single buffered']
    #allocation3 [shape = 's32[1]{0}', space=sflag, size = 0x4, scoped, tag = 'scoped memory for tpu_custom_call.1']
    #allocation4 [shape = 's32[1]{0}', space=sflag, size = 0x4, scoped, tag = 'scoped memory for tpu_custom_call.1']
    #allocation5 [shape = 'u8[8192]{0}', space=vmem, size = 0x2000, scoped, tag = 'output window, operand 0, single buffered']
    #allocation6 [shape = 'u8[8192]{0}', space=vmem, size = 0x2000, scoped, tag = 'output window, operand 1, single buffered']
    #allocation7 [shape = 's32[1]{0}', space=sflag, size = 0x4, scoped, tag = 'scoped memory for tpu_custom_call.1']
    %22 = vsyncpa [#allocation3], 0
    %23 = vsyncpa [#allocation4], 0
    %24 = vsyncpa [#allocation7], 0
    // Predicated region
    $region2: #{tpu_custom_call.1} parent=1 // pred_check
      _
    $region3: #{tpu_custom_call.1} parent=1 // pred_check_branch
      %26 = sbr.rel (0) target = $region5
    $region4: #{tpu_custom_call.1} parent=1 // pred_region
      _
    $region5: #{tpu_custom_call.1} parent=1 // pred_fallthru
      _
    // Predicated region
    $region6: #{tpu_custom_call.1} parent=1 // pred_check
      _
    $region7: #{tpu_custom_call.1} parent=1 // pred_check_branch
      %28 = sbr.rel (0) target = $region9
    $region8: #{tpu_custom_call.1} parent=1 // pred_region
      _
    $region9: #{tpu_custom_call.1} parent=1 // pred_fallthru
      _
    // Predicated region
    $region10: #{tpu_custom_call.1} parent=1 // pred_check
      _
    $region11: #{tpu_custom_call.1} parent=1 // pred_check_branch
      %30 = sbr.rel (0) target = $region13
    $region12: #{tpu_custom_call.1} parent=1 // pred_region
      _
    $region13: #{tpu_custom_call.1} parent=1 // pred_fallthru
      _
    // Predicated region
    $region14: #{tpu_custom_call.1} parent=1 // pred_check
      _
    $region15: #{tpu_custom_call.1} parent=1 // pred_check_branch
      %32 = sbr.rel (0) target = $region17
    $region16: #{tpu_custom_call.1} parent=1 // pred_region
      _
    $region17: #{tpu_custom_call.1} parent=1 // pred_fallthru
      _
    // Predicated region
    $region18: #{tpu_custom_call.1} parent=1 // pred_check
      _
    $region19: #{tpu_custom_call.1} parent=1 // pred_check_branch
      %34 = sbr.rel (0) target = $region21
    $region20: #{tpu_custom_call.1} parent=1 // pred_region
      _
    $region21: #{tpu_custom_call.1} parent=1 // pred_fallthru
      _
    // Predicated region
    $region22: #{tpu_custom_call.1} parent=1 // pred_check
      _
    $region23: #{tpu_custom_call.1} parent=1 // pred_check_branch
      %36 = sbr.rel (0) target = $region25
    $region24: #{tpu_custom_call.1} parent=1 // pred_region
      _
    $region25: #{tpu_custom_call.1} parent=1 // pred_fallthru
      _
    // Predicated region
    $region26: #{tpu_custom_call.1} parent=1 // pred_check
      _
    $region27: #{tpu_custom_call.1} parent=1 // pred_check_branch
      %38 = sbr.rel (0) target = $region29
    $region28: #{tpu_custom_call.1} parent=1 // pred_region
      _
    $region29: #{tpu_custom_call.1} parent=1 // pred_fallthru
      _
    // Predicated region
    $region30: #{tpu_custom_call.1} parent=1 // pred_check
      _
    $region31: #{tpu_custom_call.1} parent=1 // pred_check_branch
      %40 = sbr.rel (0) target = $region33
    $region32: #{tpu_custom_call.1} parent=1 // pred_region
      _
    $region33: #{tpu_custom_call.1} parent=1 // pred_fallthru
      _
    // Predicated region
    $region34: #{tpu_custom_call.1} parent=1 // pred_check
      _
    $region35: #{tpu_custom_call.1} parent=1 // pred_check_branch
      %42 = sbr.rel (0) target = $region37
    $region36: #{tpu_custom_call.1} parent=1 // pred_region
      _
    $region37: #{tpu_custom_call.1} parent=1 // pred_fallthru
      _
    // Predicated region
    $region38: #{tpu_custom_call.1} parent=1 // pred_check
      _
    $region39: #{tpu_custom_call.1} parent=1 // pred_check_branch
      %44 = sbr.rel (0) target = $region41
    $region40: #{tpu_custom_call.1} parent=1 // pred_region
      _
    $region41: #{tpu_custom_call.1} parent=1 // pred_fallthru
      _
    // Predicated region
    $region42: #{tpu_custom_call.1} parent=1 // pred_check
      _
    $region43: #{tpu_custom_call.1} parent=1 // pred_check_branch
      %46 = sbr.rel (0) target = $region45
    $region44: #{tpu_custom_call.1} parent=1 // pred_region
      _
    $region45: #{tpu_custom_call.1} parent=1 // pred_fallthru
      _
    // Predicated region
    $region46: #{tpu_custom_call.1} parent=1 // pred_check
      _
    $region47: #{tpu_custom_call.1} parent=1 // pred_check_branch
      %48 = sbr.rel (0) target = $region49
    $region48: #{tpu_custom_call.1} parent=1 // pred_region
      _
    $region49: #{tpu_custom_call.1} parent=1 // pred_fallthru
      _
    // Predicated region
    $region50: #{tpu_custom_call.1} parent=1 // pred_check
      _
    $region51: #{tpu_custom_call.1} parent=1 // pred_check_branch
      %50 = sbr.rel (0) target = $region53
    $region52: #{tpu_custom_call.1} parent=1 // pred_region
      %s52 = ssub.s32 2048, 2048
      %53 = vsyncadd [#allocation3], %s52
      %s54 = sshll.u32 [#allocation2], 4
      %s55 = int_to_ptr.vmem [resolvable:$true] %s54
      %60 = dma.hbm_to_vmem [thread:$0]  %s12, 2048, %s55, [#allocation3], 128, 128, 8
    $region53: #{tpu_custom_call.1} parent=1 // pred_fallthru
      _
    // Predicated region
    $region54: #{tpu_custom_call.1} parent=1 // pred_check
      _
    $region55: #{tpu_custom_call.1} parent=1 // pred_check_branch
      %62 = sbr.rel (0) target = $region57
    $region56: #{tpu_custom_call.1} parent=1 // pred_region
      _
    $region57: #{tpu_custom_call.1} parent=1 // pred_fallthru
      _
    // Predicated region
    $region58: #{tpu_custom_call.1} parent=1 // pred_check
      _
    $region59: #{tpu_custom_call.1} parent=1 // pred_check_branch
      %64 = sbr.rel (0) target = $region61
    $region60: #{tpu_custom_call.1} parent=1 // pred_region
      %65 = dma.done [#allocation3], 2048
    $region61: #{tpu_custom_call.1} parent=1 // pred_fallthru
      _
    %v66 = vld [vmem:[%s0] sm:$0xff]
    %v67 = vld [vmem:[%s0 + $0x8] sm:$0xff]
    %v68 = vld [vmem:[%s1] sm:$0xff]
    %v69 = vld [vmem:[%s1 + $0x8] sm:$0xff]
    %v70 = vld [vmem:[%s2] sm:$0xff]
    %v71 = vld [vmem:[%s3] sm:$0x1]
    %vm72 = vcmask 130048
    %v74 = vsel %vm72, %v66, 0
    %v77 = vsel %vm72, %v67, 0
    %79 = vmatprep.subr.mxu0 0.0
    %80 = vmatpush1.msra.mxu0 %v68
    %81 = vmatprep.subr.mxu0 0.0
    %82 = vmatpush1.msra.mxu0 %v69
    %83 = vmatprep.subr.mxu0 0.0
    %84 = vmatpush1.msra.mxu0 0.0
    %85 = vmatprep.subr.mxu0 0.0
    %86 = vmatpush1.msra.mxu0 0.0
    %87 = vmatprep.subr.mxu0 0.0
    %88 = vmatpush1.msra.mxu0 0.0
    %89 = vmatprep.subr.mxu0 0.0
    %90 = vmatpush1.msra.mxu0 0.0
    %91 = vmatprep.subr.mxu0 0.0
    %92 = vmatpush1.msra.mxu0 0.0
    %93 = vmatprep.subr.mxu0 0.0
    %94 = vmatpush1.msra.mxu0 0.0
    %95 = vmatprep.subr.mxu0 0.0
    %96 = vmatpush1.msra.mxu0 0.0
    %97 = vmatprep.subr.mxu0 0.0
    %98 = vmatpush1.msra.mxu0 0.0
    %99 = vmatprep.subr.mxu0 0.0
    %100 = vmatpush1.msra.mxu0 0.0
    %101 = vmatprep.subr.mxu0 0.0
    %102 = vmatpush1.msra.mxu0 0.0
    %103 = vmatprep.subr.mxu0 0.0
    %104 = vmatpush1.msra.mxu0 0.0
    %105 = vmatprep.subr.mxu0 0.0
    %106 = vmatpush1.msra.mxu0 0.0
    %107 = vmatprep.subr.mxu0 0.0
    %108 = vmatpush1.msra.mxu0 0.0
    %109 = vmatprep.subr.mxu0 0.0
    %110 = vmatpush1.msra.mxu0 0.0
    %111 = vmatprep.subr.mxu0 0.0
    %112 = vmatpush1.msra.mxu0 0.0
    %113 = vmatprep.subr.mxu0 0.0
    %114 = vmatpush1.msra.mxu0 0.0
    %115 = vmatprep.subr.mxu0 0.0
    %116 = vmatpush1.msra.mxu0 0.0
    %117 = vmatprep.subr.mxu0 0.0
    %118 = vmatpush1.msra.mxu0 0.0
    %119 = vmatprep.subr.mxu0 0.0
    %120 = vmatpush1.msra.mxu0 0.0
    %121 = vmatprep.subr.mxu0 0.0
    %122 = vmatpush1.msra.mxu0 0.0
    %123 = vmatprep.subr.mxu0 0.0
    %124 = vmatpush1.msra.mxu0 0.0
    %125 = vmatprep.subr.mxu0 0.0
    %126 = vmatpush1.msra.mxu0 0.0
    %127 = vmatprep.subr.mxu0 0.0
    %128 = vmatpush1.msra.mxu0 0.0
    %129 = vmatprep.subr.mxu0 0.0
    %130 = vmatpush1.msra.mxu0 0.0
    %131 = vmatprep.subr.mxu0 0.0
    %132 = vmatpush1.msra.mxu0 0.0
    %133 = vmatprep.subr.mxu0 0.0
    %134 = vmatpush1.msra.mxu0 0.0
    %135 = vmatprep.subr.mxu0 0.0
    %136 = vmatpush1.msra.mxu0 0.0
    %137 = vmatprep.subr.mxu0 0.0
    %138 = vmatpush1.msra.mxu0 0.0
    %139 = vmatprep.subr.mxu0 0.0
    %140 = vmatpush1.msra.mxu0 0.0
    %141 = vmatprep.subr.mxu0 0.0
    %142 = vmatpush1.msra.mxu0 0.0
    %143 = vmatprep.mubr.f32.mxu0 0.0
    %144 = vmatmul.mubr.f32.gmra.mrb[0].mxu0 %v74
    %v145 = vpop.f32.mrb[0].mxu0
    %v146 = vadd.f32 0.0, %v145
    %v147 = vpop.f32.mrb[0].mxu0
    %148 = vmatprep.mubr.f32.mxu0 0.0
    %149 = vmatmul.mubr.f32.gmra.mrb[0].mxu0 %v77
    %v150 = vpop.f32.mrb[0].mxu0
    %v151 = vadd.f32 0.0, %v150
    %v152 = vpop.f32.mrb[0].mxu0
    %153 = vdwg.mxu0
    %v155 = vlaneseq
    %v156 = vshrl.u32 %v155, 7
    %v157 = vsub.s32 0, %v156
    %v158 = vrot.slane %v71, %v157
    %vm160 = vcmask 64512
    %v162 = vsel %vm160, %v146, 0
    %v165 = vsel %vm160, %v151, 0
    %167 = vmatprep.subr.mxu0 0.0
    %168 = vmatpush1.msra.mxu0 %v70
    %169 = vmatprep.subr.mxu0 0.0
    %170 = vmatpush1.msra.mxu0 0.0
    %171 = vmatprep.subr.mxu0 0.0
    %172 = vmatpush1.msra.mxu0 0.0
    %173 = vmatprep.subr.mxu0 0.0
    %174 = vmatpush1.msra.mxu0 0.0
    %175 = vmatprep.subr.mxu0 0.0
    %176 = vmatpush1.msra.mxu0 0.0
    %177 = vmatprep.subr.mxu0 0.0
    %178 = vmatpush1.msra.mxu0 0.0
    %179 = vmatprep.subr.mxu0 0.0
    %180 = vmatpush1.msra.mxu0 0.0
    %181 = vmatprep.subr.mxu0 0.0
    %182 = vmatpush1.msra.mxu0 0.0
    %183 = vmatprep.subr.mxu0 0.0
    %184 = vmatpush1.msra.mxu0 0.0
    %185 = vmatprep.subr.mxu0 0.0
    %186 = vmatpush1.msra.mxu0 0.0
    %187 = vmatprep.subr.mxu0 0.0
    %188 = vmatpush1.msra.mxu0 0.0
    %189 = vmatprep.subr.mxu0 0.0
    %190 = vmatpush1.msra.mxu0 0.0
    %191 = vmatprep.subr.mxu0 0.0
    %192 = vmatpush1.msra.mxu0 0.0
    %193 = vmatprep.subr.mxu0 0.0
    %194 = vmatpush1.msra.mxu0 0.0
    %195 = vmatprep.subr.mxu0 0.0
    %196 = vmatpush1.msra.mxu0 0.0
    %197 = vmatprep.subr.mxu0 0.0
    %198 = vmatpush1.msra.mxu0 0.0
    %199 = vmatprep.subr.mxu0 0.0
    %200 = vmatpush1.msra.mxu0 0.0
    %201 = vmatprep.subr.mxu0 0.0
    %202 = vmatpush1.msra.mxu0 0.0
    %203 = vmatprep.subr.mxu0 0.0
    %204 = vmatpush1.msra.mxu0 0.0
    %205 = vmatprep.subr.mxu0 0.0
    %206 = vmatpush1.msra.mxu0 0.0
    %207 = vmatprep.subr.mxu0 0.0
    %208 = vmatpush1.msra.mxu0 0.0
    %209 = vmatprep.subr.mxu0 0.0
    %210 = vmatpush1.msra.mxu0 0.0
    %211 = vmatprep.subr.mxu0 0.0
    %212 = vmatpush1.msra.mxu0 0.0
    %213 = vmatprep.subr.mxu0 0.0
    %214 = vmatpush1.msra.mxu0 0.0
    %215 = vmatprep.subr.mxu0 0.0
    %216 = vmatpush1.msra.mxu0 0.0
    %217 = vmatprep.subr.mxu0 0.0
    %218 = vmatpush1.msra.mxu0 0.0
    %219 = vmatprep.subr.mxu0 0.0
    %220 = vmatpush1.msra.mxu0 0.0
    %221 = vmatprep.subr.mxu0 0.0
    %222 = vmatpush1.msra.mxu0 0.0
    %223 = vmatprep.subr.mxu0 0.0
    %224 = vmatpush1.msra.mxu0 0.0
    %225 = vmatprep.subr.mxu0 0.0
    %226 = vmatpush1.msra.mxu0 0.0
    %227 = vmatprep.subr.mxu0 0.0
    %228 = vmatpush1.msra.mxu0 0.0
    %229 = vmatprep.subr.mxu0 0.0
    %230 = vmatpush1.msra.mxu0 0.0
    %231 = vmatprep.mubr.f32.mxu0 0.0
    %232 = vmatmul.mubr.f32.gmra.mrb[0].mxu0 %v162
    %v233 = vpop.f32.mrb[0].mxu0
    %v234 = vadd.f32 %v158, %v233
    %v235 = vpop.f32.mrb[0].mxu0
    %236 = vmatprep.mubr.f32.mxu0 0.0
    %237 = vmatmul.mubr.f32.gmra.mrb[0].mxu0 %v165
    %v238 = vpop.f32.mrb[0].mxu0
    %v239 = vadd.f32 %v158, %v238
    %v240 = vpop.f32.mrb[0].mxu0
    %241 = vdwg.mxu0
    %v242 = vmax.f32 %v234, 0.0
    %v243 = vmax.f32 %v239, 0.0
    %v244 = vld [vmem:[%s4] sm:$0xff]
    %v245 = vld [vmem:[%s4 + $0x8] sm:$0xff]
    %v246 = vld [vmem:[%s4 + $0x10] sm:$0xff]
    %v247 = vld [vmem:[%s4 + $0x18] sm:$0xff]
    %v248 = vld [vmem:[%s4 + $0x20] sm:$0xff]
    %v249 = vld [vmem:[%s4 + $0x28] sm:$0xff]
    %v250 = vld [vmem:[%s4 + $0x30] sm:$0xff]
    %v251 = vld [vmem:[%s4 + $0x38] sm:$0xff]
    %v252 = vld [vmem:[%s4 + $0x40] sm:$0xff]
    %v253 = vld [vmem:[%s4 + $0x48] sm:$0xff]
    %v254 = vld [vmem:[%s4 + $0x50] sm:$0xff]
    %v255 = vld [vmem:[%s4 + $0x58] sm:$0xff]
    %v256 = vld [vmem:[%s4 + $0x60] sm:$0xff]
    %v257 = vld [vmem:[%s4 + $0x68] sm:$0xff]
    %v258 = vld [vmem:[%s4 + $0x70] sm:$0xff]
    %v259 = vld [vmem:[%s4 + $0x78] sm:$0xff]
    %v260 = vld [vmem:[%s5] sm:$0x1]
    %261 = vmatprep.subr.mxu0 0.0
    %262 = vmatpush1.msra.mxu0 %v242
    %263 = vmatprep.subr.mxu0 0.0
    %264 = vmatpush1.msra.mxu0 %v243
    %265 = vmatprep.subr.mxu0 0.0
    %266 = vmatpush1.msra.mxu0 0.0
    %267 = vmatprep.subr.mxu0 0.0
    %268 = vmatpush1.msra.mxu0 0.0
    %269 = vmatprep.subr.mxu0 0.0
    %270 = vmatpush1.msra.mxu0 0.0
    %271 = vmatprep.subr.mxu0 0.0
    %272 = vmatpush1.msra.mxu0 0.0
    %273 = vmatprep.subr.mxu0 0.0
    %274 = vmatpush1.msra.mxu0 0.0
    %275 = vmatprep.subr.mxu0 0.0
    %276 = vmatpush1.msra.mxu0 0.0
    %277 = vmatprep.subr.mxu0 0.0
    %278 = vmatpush1.msra.mxu0 0.0
    %279 = vmatprep.subr.mxu0 0.0
    %280 = vmatpush1.msra.mxu0 0.0
    %281 = vmatprep.subr.mxu0 0.0
    %282 = vmatpush1.msra.mxu0 0.0
    %283 = vmatprep.subr.mxu0 0.0
    %284 = vmatpush1.msra.mxu0 0.0
    %285 = vmatprep.subr.mxu0 0.0
    %286 = vmatpush1.msra.mxu0 0.0
    %287 = vmatprep.subr.mxu0 0.0
    %288 = vmatpush1.msra.mxu0 0.0
    %289 = vmatprep.subr.mxu0 0.0
    %290 = vmatpush1.msra.mxu0 0.0
    %291 = vmatprep.subr.mxu0 0.0
    %292 = vmatpush1.msra.mxu0 0.0
    %293 = vmatprep.subr.mxu0 0.0
    %294 = vmatpush1.msra.mxu0 0.0
    %295 = vmatprep.subr.mxu0 0.0
    %296 = vmatpush1.msra.mxu0 0.0
    %297 = vmatprep.subr.mxu0 0.0
    %298 = vmatpush1.msra.mxu0 0.0
    %299 = vmatprep.subr.mxu0 0.0
    %300 = vmatpush1.msra.mxu0 0.0
    %301 = vmatprep.subr.mxu0 0.0
    %302 = vmatpush1.msra.mxu0 0.0
    %303 = vmatprep.subr.mxu0 0.0
    %304 = vmatpush1.msra.mxu0 0.0
    %305 = vmatprep.subr.mxu0 0.0
    %306 = vmatpush1.msra.mxu0 0.0
    %307 = vmatprep.subr.mxu0 0.0
    %308 = vmatpush1.msra.mxu0 0.0
    %309 = vmatprep.subr.mxu0 0.0
    %310 = vmatpush1.msra.mxu0 0.0
    %311 = vmatprep.subr.mxu0 0.0
    %312 = vmatpush1.msra.mxu0 0.0
    %313 = vmatprep.subr.mxu0 0.0
    %314 = vmatpush1.msra.mxu0 0.0
    %315 = vmatprep.subr.mxu0 0.0
    %316 = vmatpush1.msra.mxu0 0.0
    %317 = vmatprep.subr.mxu0 0.0
    %318 = vmatpush1.msra.mxu0 0.0
    %319 = vmatprep.subr.mxu0 0.0
    %320 = vmatpush1.msra.mxu0 0.0
    %321 = vmatprep.subr.mxu0 0.0
    %322 = vmatpush1.msra.mxu0 0.0
    %323 = vmatprep.subr.mxu0 0.0
    %324 = vmatpush1.msra.mxu0 0.0
    %325 = vmatprep.mubr.f32.mxu0 0.0
    %326 = vmatmul.mubr.f32.gmra.mrb[0].mxu0 %v74
    %v327 = vpop.f32.mrb[0].mxu0
    %v328 = vadd.f32 0.0, %v327
    %v329 = vpop.f32.mrb[0].mxu0
    %330 = vmatprep.mubr.f32.mxu0 0.0
    %331 = vmatmul.mubr.f32.gmra.mrb[0].mxu0 %v77
    %v332 = vpop.f32.mrb[0].mxu0
    %v333 = vadd.f32 0.0, %v332
    %v334 = vpop.f32.mrb[0].mxu0
    %335 = vdwg.mxu0
    %v337 = vlaneseq
    %v338 = vshrl.u32 %v337, 7
    %v339 = vsub.s32 0, %v338
    %v340 = vrot.slane %v260, %v339
    %342 = vmatprep.subr.mxu0 0.0
    %343 = vmatpush1.msra.mxu0 %v244
    %344 = vmatprep.subr.mxu0 0.0
    %345 = vmatpush1.msra.mxu0 %v245
    %346 = vmatprep.subr.mxu0 0.0
    %347 = vmatpush1.msra.mxu0 %v246
    %348 = vmatprep.subr.mxu0 0.0
    %349 = vmatpush1.msra.mxu0 %v247
    %350 = vmatprep.subr.mxu0 0.0
    %351 = vmatpush1.msra.mxu0 %v248
    %352 = vmatprep.subr.mxu0 0.0
    %353 = vmatpush1.msra.mxu0 %v249
    %354 = vmatprep.subr.mxu0 0.0
    %355 = vmatpush1.msra.mxu0 %v250
    %356 = vmatprep.subr.mxu0 0.0
    %357 = vmatpush1.msra.mxu0 %v251
    %358 = vmatprep.subr.mxu0 0.0
    %359 = vmatpush1.msra.mxu0 %v252
    %360 = vmatprep.subr.mxu0 0.0
    %361 = vmatpush1.msra.mxu0 %v253
    %362 = vmatprep.subr.mxu0 0.0
    %363 = vmatpush1.msra.mxu0 %v254
    %364 = vmatprep.subr.mxu0 0.0
    %365 = vmatpush1.msra.mxu0 %v255
    %366 = vmatprep.subr.mxu0 0.0
    %367 = vmatpush1.msra.mxu0 %v256
    %368 = vmatprep.subr.mxu0 0.0
    %369 = vmatpush1.msra.mxu0 %v257
    %370 = vmatprep.subr.mxu0 0.0
    %371 = vmatpush1.msra.mxu0 %v258
    %372 = vmatprep.subr.mxu0 0.0
    %373 = vmatpush1.msra.mxu0 %v259
    %374 = vmatprep.subr.mxu0 0.0
    %375 = vmatpush1.msra.mxu0 0.0
    %376 = vmatprep.subr.mxu0 0.0
    %377 = vmatpush1.msra.mxu0 0.0
    %378 = vmatprep.subr.mxu0 0.0
    %379 = vmatpush1.msra.mxu0 0.0
    %380 = vmatprep.subr.mxu0 0.0
    %381 = vmatpush1.msra.mxu0 0.0
    %382 = vmatprep.subr.mxu0 0.0
    %383 = vmatpush1.msra.mxu0 0.0
    %384 = vmatprep.subr.mxu0 0.0
    %385 = vmatpush1.msra.mxu0 0.0
    %386 = vmatprep.subr.mxu0 0.0
    %387 = vmatpush1.msra.mxu0 0.0
    %388 = vmatprep.subr.mxu0 0.0
    %389 = vmatpush1.msra.mxu0 0.0
    %390 = vmatprep.subr.mxu0 0.0
    %391 = vmatpush1.msra.mxu0 0.0
    %392 = vmatprep.subr.mxu0 0.0
    %393 = vmatpush1.msra.mxu0 0.0
    %394 = vmatprep.subr.mxu0 0.0
    %395 = vmatpush1.msra.mxu0 0.0
    %396 = vmatprep.subr.mxu0 0.0
    %397 = vmatpush1.msra.mxu0 0.0
    %398 = vmatprep.subr.mxu0 0.0
    %399 = vmatpush1.msra.mxu0 0.0
    %400 = vmatprep.subr.mxu0 0.0
    %401 = vmatpush1.msra.mxu0 0.0
    %402 = vmatprep.subr.mxu0 0.0
    %403 = vmatpush1.msra.mxu0 0.0
    %404 = vmatprep.subr.mxu0 0.0
    %405 = vmatpush1.msra.mxu0 0.0
    %406 = vmatprep.mubr.f32.mxu0 0.0
    %407 = vmatmul.mubr.f32.gmra.mrb[0].mxu0 %v328
    %v408 = vpop.f32.mrb[0].mxu0
    %v409 = vadd.f32 %v340, %v408
    %v410 = vpop.f32.mrb[0].mxu0
    %411 = vmatprep.mubr.f32.mxu0 0.0
    %412 = vmatmul.mubr.f32.gmra.mrb[0].mxu0 %v333
    %v413 = vpop.f32.mrb[0].mxu0
    %v414 = vadd.f32 %v340, %v413
    %v415 = vpop.f32.mrb[0].mxu0
    %416 = vdwg.mxu0
    %v417 = vmax.f32 %v409, 0.0
    %v418 = vmax.f32 %v414, 0.0
    %419 = vst [vmem:[#allocation5] sm:$0xff] %v417
    %420 = vst [vmem:[#allocation5 + $0x8] sm:$0xff] %v418
    %v421 = vld [vmem:[%s6] sm:$0xff]
    %v422 = vld [vmem:[%s6 + $0x8] sm:$0xff]
    %v423 = vld [vmem:[%s6 + $0x10] sm:$0xff]
    %v424 = vld [vmem:[%s6 + $0x18] sm:$0xff]
    %v425 = vld [vmem:[%s6 + $0x20] sm:$0xff]
    %v426 = vld [vmem:[%s6 + $0x28] sm:$0xff]
    %v427 = vld [vmem:[%s6 + $0x30] sm:$0xff]
    %v428 = vld [vmem:[%s6 + $0x38] sm:$0xff]
    %v429 = vld [vmem:[%s6 + $0x40] sm:$0xff]
    %v430 = vld [vmem:[%s6 + $0x48] sm:$0xff]
    %v431 = vld [vmem:[%s6 + $0x50] sm:$0xff]
    %v432 = vld [vmem:[%s6 + $0x58] sm:$0xff]
    %v433 = vld [vmem:[%s6 + $0x60] sm:$0xff]
    %v434 = vld [vmem:[%s6 + $0x68] sm:$0xff]
    %v435 = vld [vmem:[%s6 + $0x70] sm:$0xff]
    %v436 = vld [vmem:[%s6 + $0x78] sm:$0xff]
    %v437 = vld [vmem:[%s7] sm:$0x1]
    %438 = vmatprep.subr.mxu0 0.0
    %439 = vmatpush1.msra.mxu0 %v421
    %440 = vmatprep.subr.mxu0 0.0
    %441 = vmatpush1.msra.mxu0 %v422
    %442 = vmatprep.subr.mxu0 0.0
    %443 = vmatpush1.msra.mxu0 %v423
    %444 = vmatprep.subr.mxu0 0.0
    %445 = vmatpush1.msra.mxu0 %v424
    %446 = vmatprep.subr.mxu0 0.0
    %447 = vmatpush1.msra.mxu0 %v425
    %448 = vmatprep.subr.mxu0 0.0
    %449 = vmatpush1.msra.mxu0 %v426
    %450 = vmatprep.subr.mxu0 0.0
    %451 = vmatpush1.msra.mxu0 %v427
    %452 = vmatprep.subr.mxu0 0.0
    %453 = vmatpush1.msra.mxu0 %v428
    %454 = vmatprep.subr.mxu0 0.0
    %455 = vmatpush1.msra.mxu0 %v429
    %456 = vmatprep.subr.mxu0 0.0
    %457 = vmatpush1.msra.mxu0 %v430
    %458 = vmatprep.subr.mxu0 0.0
    %459 = vmatpush1.msra.mxu0 %v431
    %460 = vmatprep.subr.mxu0 0.0
    %461 = vmatpush1.msra.mxu0 %v432
    %462 = vmatprep.subr.mxu0 0.0
    %463 = vmatpush1.msra.mxu0 %v433
    %464 = vmatprep.subr.mxu0 0.0
    %465 = vmatpush1.msra.mxu0 %v434
    %466 = vmatprep.subr.mxu0 0.0
    %467 = vmatpush1.msra.mxu0 %v435
    %468 = vmatprep.subr.mxu0 0.0
    %469 = vmatpush1.msra.mxu0 %v436
    %470 = vmatprep.subr.mxu0 0.0
    %471 = vmatpush1.msra.mxu0 0.0
    %472 = vmatprep.subr.mxu0 0.0
    %473 = vmatpush1.msra.mxu0 0.0
    %474 = vmatprep.subr.mxu0 0.0
    %475 = vmatpush1.msra.mxu0 0.0
    %476 = vmatprep.subr.mxu0 0.0
    %477 = vmatpush1.msra.mxu0 0.0
    %478 = vmatprep.subr.mxu0 0.0
    %479 = vmatpush1.msra.mxu0 0.0
    %480 = vmatprep.subr.mxu0 0.0
    %481 = vmatpush1.msra.mxu0 0.0
    %482 = vmatprep.subr.mxu0 0.0
    %483 = vmatpush1.msra.mxu0 0.0
    %484 = vmatprep.subr.mxu0 0.0
    %485 = vmatpush1.msra.mxu0 0.0
    %486 = vmatprep.subr.mxu0 0.0
    %487 = vmatpush1.msra.mxu0 0.0
    %488 = vmatprep.subr.mxu0 0.0
    %489 = vmatpush1.msra.mxu0 0.0
    %490 = vmatprep.subr.mxu0 0.0
    %491 = vmatpush1.msra.mxu0 0.0
    %492 = vmatprep.subr.mxu0 0.0
    %493 = vmatpush1.msra.mxu0 0.0
    %494 = vmatprep.subr.mxu0 0.0
    %495 = vmatpush1.msra.mxu0 0.0
    %496 = vmatprep.subr.mxu0 0.0
    %497 = vmatpush1.msra.mxu0 0.0
    %498 = vmatprep.subr.mxu0 0.0
    %499 = vmatpush1.msra.mxu0 0.0
    %500 = vmatprep.subr.mxu0 0.0
    %501 = vmatpush1.msra.mxu0 0.0
    %502 = vmatprep.mubr.f32.mxu0 0.0
    %503 = vmatmul.mubr.f32.gmra.mrb[0].mxu0 %v417
    %v504 = vpop.f32.mrb[0].mxu0
    %v505 = vadd.f32 0.0, %v504
    %v506 = vpop.f32.mrb[0].mxu0
    %507 = vmatprep.mubr.f32.mxu0 0.0
    %508 = vmatmul.mubr.f32.gmra.mrb[0].mxu0 %v418
    %v509 = vpop.f32.mrb[0].mxu0
    %v510 = vadd.f32 0.0, %v509
    %v511 = vpop.f32.mrb[0].mxu0
    %512 = vdwg.mxu0
    %v514 = vlaneseq
    %v515 = vshrl.u32 %v514, 7
    %v516 = vsub.s32 0, %v515
    %v517 = vrot.slane %v437, %v516
    %519 = vmatprep.subr.mxu0 0.0
    %520 = vmatpush1.msra.mxu0 %v505
    %521 = vmatprep.subr.mxu0 0.0
    %522 = vmatpush1.msra.mxu0 %v510
    %523 = vmatprep.subr.mxu0 0.0
    %524 = vmatpush1.msra.mxu0 0.0
    %525 = vmatprep.subr.mxu0 0.0
    %526 = vmatpush1.msra.mxu0 0.0
    %527 = vmatprep.subr.mxu0 0.0
    %528 = vmatpush1.msra.mxu0 0.0
    %529 = vmatprep.subr.mxu0 0.0
    %530 = vmatpush1.msra.mxu0 0.0
    %531 = vmatprep.subr.mxu0 0.0
    %532 = vmatpush1.msra.mxu0 0.0
    %533 = vmatprep.subr.mxu0 0.0
    %534 = vmatpush1.msra.mxu0 0.0
    %535 = vmatprep.subr.mxu0 0.0
    %536 = vmatpush1.msra.mxu0 0.0
    %537 = vmatprep.subr.mxu0 0.0
    %538 = vmatpush1.msra.mxu0 0.0
    %539 = vmatprep.subr.mxu0 0.0
    %540 = vmatpush1.msra.mxu0 0.0
    %541 = vmatprep.subr.mxu0 0.0
    %542 = vmatpush1.msra.mxu0 0.0
    %543 = vmatprep.subr.mxu0 0.0
    %544 = vmatpush1.msra.mxu0 0.0
    %545 = vmatprep.subr.mxu0 0.0
    %546 = vmatpush1.msra.mxu0 0.0
    %547 = vmatprep.subr.mxu0 0.0
    %548 = vmatpush1.msra.mxu0 0.0
    %549 = vmatprep.subr.mxu0 0.0
    %550 = vmatpush1.msra.mxu0 0.0
    %551 = vmatprep.subr.mxu0 0.0
    %552 = vmatpush1.msra.mxu0 0.0
    %553 = vmatprep.subr.mxu0 0.0
    %554 = vmatpush1.msra.mxu0 0.0
    %555 = vmatprep.subr.mxu0 0.0
    %556 = vmatpush1.msra.mxu0 0.0
    %557 = vmatprep.subr.mxu0 0.0
    %558 = vmatpush1.msra.mxu0 0.0
    %559 = vmatprep.subr.mxu0 0.0
    %560 = vmatpush1.msra.mxu0 0.0
    %561 = vmatprep.subr.mxu0 0.0
    %562 = vmatpush1.msra.mxu0 0.0
    %563 = vmatprep.subr.mxu0 0.0
    %564 = vmatpush1.msra.mxu0 0.0
    %565 = vmatprep.subr.mxu0 0.0
    %566 = vmatpush1.msra.mxu0 0.0
    %567 = vmatprep.subr.mxu0 0.0
    %568 = vmatpush1.msra.mxu0 0.0
    %569 = vmatprep.subr.mxu0 0.0
    %570 = vmatpush1.msra.mxu0 0.0
    %571 = vmatprep.subr.mxu0 0.0
    %572 = vmatpush1.msra.mxu0 0.0
    %573 = vmatprep.subr.mxu0 0.0
    %574 = vmatpush1.msra.mxu0 0.0
    %575 = vmatprep.subr.mxu0 0.0
    %576 = vmatpush1.msra.mxu0 0.0
    %577 = vmatprep.subr.mxu0 0.0
    %578 = vmatpush1.msra.mxu0 0.0
    %579 = vmatprep.subr.mxu0 0.0
    %580 = vmatpush1.msra.mxu0 0.0
    %581 = vmatprep.subr.mxu0 0.0
    %582 = vmatpush1.msra.mxu0 0.0
    %583 = vmatprep.mubr.f32.mxu0 0.0
    %584 = vmatmul.mubr.f32.gmra.mrb[0].mxu0 %v74
    %v585 = vpop.f32.mrb[0].mxu0
    %v586 = vadd.f32 %v517, %v585
    %v587 = vpop.f32.mrb[0].mxu0
    %588 = vmatprep.mubr.f32.mxu0 0.0
    %589 = vmatmul.mubr.f32.gmra.mrb[0].mxu0 %v77
    %v590 = vpop.f32.mrb[0].mxu0
    %v591 = vadd.f32 %v517, %v590
    %v592 = vpop.f32.mrb[0].mxu0
    %593 = vdwg.mxu0
    %vm594 = vcmask 23552
    %v595 = vsel %vm594, %v586, -inf
    %596 = vmax.xlane.f32.xlu0 %v595
    %v597 = vpop.xlane.xlu0 %596
    %v598 = vsel %vm594, %v591, -inf
    %599 = vmax.xlane.f32.xlu0 %v598
    %v600 = vpop.xlane.xlu0 %599
    %v601 = vsub.f32 %v586, %v597
    %v602 = vsub.f32 %v591, %v600
    %v603 = vmul.f32 %v601, 1.442695
    %v604 = vpow.pop %v603
    %v605 = vmul.f32 %v602, 1.442695
    %v606 = vpow.pop %v605
    %v607 = vsel %vm594, %v604, 0.0
    %608 = vadd.xlane.f32.xlu0 %v607
    %v609 = vpop.xlane.xlu0 %608
    %v610 = vsel %vm594, %v606, 0.0
    %611 = vadd.xlane.f32.xlu0 %v610
    %v612 = vpop.xlane.xlu0 %611
    %v613 = vlog2.pop %v609
    %v614 = vmul.f32 %v613, 0.6931472
    %v615 = vlog2.pop %v612
    %v616 = vmul.f32 %v615, 0.6931472
    %v617 = vsub.f32 %v601, %v614
    %v618 = vsub.f32 %v602, %v616
    %619 = vst.msk [vmem:[%s16] sm:$0xff] %vm594, %v617
    %620 = vst.msk [vmem:[%s16 + $0x8] sm:$0xff] %vm594, %v618
    %v621 = vld [vmem:[%s8] sm:$0xff]
    %v622 = vld [vmem:[%s8 + $0x8] sm:$0xff]
    %v623 = vld [vmem:[%s9] sm:$0xff]
    %v624 = vld [vmem:[%s9 + $0x8] sm:$0xff]
    %v625 = vld [vmem:[%s10] sm:$0x3f]
    %v626 = vld [vmem:[%s11] sm:$0x1]
    %v628 = vsel %vm72, %v621, 0
    %v631 = vsel %vm72, %v622, 0
    %633 = vmatprep.subr.mxu0 0.0
    %634 = vmatpush1.msra.mxu0 %v623
    %635 = vmatprep.subr.mxu0 0.0
    %636 = vmatpush1.msra.mxu0 %v624
    %637 = vmatprep.subr.mxu0 0.0
    %638 = vmatpush1.msra.mxu0 0.0
    %639 = vmatprep.subr.mxu0 0.0
    %640 = vmatpush1.msra.mxu0 0.0
    %641 = vmatprep.subr.mxu0 0.0
    %642 = vmatpush1.msra.mxu0 0.0
    %643 = vmatprep.subr.mxu0 0.0
    %644 = vmatpush1.msra.mxu0 0.0
    %645 = vmatprep.subr.mxu0 0.0
    %646 = vmatpush1.msra.mxu0 0.0
    %647 = vmatprep.subr.mxu0 0.0
    %648 = vmatpush1.msra.mxu0 0.0
    %649 = vmatprep.subr.mxu0 0.0
    %650 = vmatpush1.msra.mxu0 0.0
    %651 = vmatprep.subr.mxu0 0.0
    %652 = vmatpush1.msra.mxu0 0.0
    %653 = vmatprep.subr.mxu0 0.0
    %654 = vmatpush1.msra.mxu0 0.0
    %655 = vmatprep.subr.mxu0 0.0
    %656 = vmatpush1.msra.mxu0 0.0
    %657 = vmatprep.subr.mxu0 0.0
    %658 = vmatpush1.msra.mxu0 0.0
    %659 = vmatprep.subr.mxu0 0.0
    %660 = vmatpush1.msra.mxu0 0.0
    %661 = vmatprep.subr.mxu0 0.0
    %662 = vmatpush1.msra.mxu0 0.0
    %663 = vmatprep.subr.mxu0 0.0
    %664 = vmatpush1.msra.mxu0 0.0
    %665 = vmatprep.subr.mxu0 0.0
    %666 = vmatpush1.msra.mxu0 0.0
    %667 = vmatprep.subr.mxu0 0.0
    %668 = vmatpush1.msra.mxu0 0.0
    %669 = vmatprep.subr.mxu0 0.0
    %670 = vmatpush1.msra.mxu0 0.0
    %671 = vmatprep.subr.mxu0 0.0
    %672 = vmatpush1.msra.mxu0 0.0
    %673 = vmatprep.subr.mxu0 0.0
    %674 = vmatpush1.msra.mxu0 0.0
    %675 = vmatprep.subr.mxu0 0.0
    %676 = vmatpush1.msra.mxu0 0.0
    %677 = vmatprep.subr.mxu0 0.0
    %678 = vmatpush1.msra.mxu0 0.0
    %679 = vmatprep.subr.mxu0 0.0
    %680 = vmatpush1.msra.mxu0 0.0
    %681 = vmatprep.subr.mxu0 0.0
    %682 = vmatpush1.msra.mxu0 0.0
    %683 = vmatprep.subr.mxu0 0.0
    %684 = vmatpush1.msra.mxu0 0.0
    %685 = vmatprep.subr.mxu0 0.0
    %686 = vmatpush1.msra.mxu0 0.0
    %687 = vmatprep.subr.mxu0 0.0
    %688 = vmatpush1.msra.mxu0 0.0
    %689 = vmatprep.subr.mxu0 0.0
    %690 = vmatpush1.msra.mxu0 0.0
    %691 = vmatprep.subr.mxu0 0.0
    %692 = vmatpush1.msra.mxu0 0.0
    %693 = vmatprep.subr.mxu0 0.0
    %694 = vmatpush1.msra.mxu0 0.0
    %695 = vmatprep.subr.mxu0 0.0
    %696 = vmatpush1.msra.mxu0 0.0
    %697 = vmatprep.mubr.f32.mxu0 0.0
    %698 = vmatmul.mubr.f32.gmra.mrb[0].mxu0 %v628
    %v699 = vpop.f32.mrb[0].mxu0
    %v700 = vadd.f32 0.0, %v699
    %v701 = vpop.f32.mrb[0].mxu0
    %702 = vmatprep.mubr.f32.mxu0 0.0
    %703 = vmatmul.mubr.f32.gmra.mrb[0].mxu0 %v631
    %v704 = vpop.f32.mrb[0].mxu0
    %v705 = vadd.f32 0.0, %v704
    %v706 = vpop.f32.mrb[0].mxu0
    %707 = vdwg.mxu0
    %v709 = vlaneseq
    %v710 = vshrl.u32 %v709, 7
    %v711 = vsub.s32 0, %v710
    %v712 = vrot.slane %v626, %v711
    %vm714 = vcmask 48128
    %v716 = vsel %vm714, %v700, 0
    %v719 = vsel %vm714, %v705, 0
    %vm721 = vcmask 1045504
    %v723 = vsel %vm721, %v625, 0
    %725 = vmatprep.subr.mxu0 0.0
    %726 = vmatpush1.msra.mxu0 %v723
    %727 = vmatprep.subr.mxu0 0.0
    %728 = vmatpush1.msra.mxu0 0.0
    %729 = vmatprep.subr.mxu0 0.0
    %730 = vmatpush1.msra.mxu0 0.0
    %731 = vmatprep.subr.mxu0 0.0
    %732 = vmatpush1.msra.mxu0 0.0
    %733 = vmatprep.subr.mxu0 0.0
    %734 = vmatpush1.msra.mxu0 0.0
    %735 = vmatprep.subr.mxu0 0.0
    %736 = vmatpush1.msra.mxu0 0.0
    %737 = vmatprep.subr.mxu0 0.0
    %738 = vmatpush1.msra.mxu0 0.0
    %739 = vmatprep.subr.mxu0 0.0
    %740 = vmatpush1.msra.mxu0 0.0
    %741 = vmatprep.subr.mxu0 0.0
    %742 = vmatpush1.msra.mxu0 0.0
    %743 = vmatprep.subr.mxu0 0.0
    %744 = vmatpush1.msra.mxu0 0.0
    %745 = vmatprep.subr.mxu0 0.0
    %746 = vmatpush1.msra.mxu0 0.0
    %747 = vmatprep.subr.mxu0 0.0
    %748 = vmatpush1.msra.mxu0 0.0
    %749 = vmatprep.subr.mxu0 0.0
    %750 = vmatpush1.msra.mxu0 0.0
    %751 = vmatprep.subr.mxu0 0.0
    %752 = vmatpush1.msra.mxu0 0.0
    %753 = vmatprep.subr.mxu0 0.0
    %754 = vmatpush1.msra.mxu0 0.0
    %755 = vmatprep.subr.mxu0 0.0
    %756 = vmatpush1.msra.mxu0 0.0
    %757 = vmatprep.subr.mxu0 0.0
    %758 = vmatpush1.msra.mxu0 0.0
    %759 = vmatprep.subr.mxu0 0.0
    %760 = vmatpush1.msra.mxu0 0.0
    %761 = vmatprep.subr.mxu0 0.0
    %762 = vmatpush1.msra.mxu0 0.0
    %763 = vmatprep.subr.mxu0 0.0
    %764 = vmatpush1.msra.mxu0 0.0
    %765 = vmatprep.subr.mxu0 0.0
    %766 = vmatpush1.msra.mxu0 0.0
    %767 = vmatprep.subr.mxu0 0.0
    %768 = vmatpush1.msra.mxu0 0.0
    %769 = vmatprep.subr.mxu0 0.0
    %770 = vmatpush1.msra.mxu0 0.0
    %771 = vmatprep.subr.mxu0 0.0
    %772 = vmatpush1.msra.mxu0 0.0
    %773 = vmatprep.subr.mxu0 0.0
    %774 = vmatpush1.msra.mxu0 0.0
    %775 = vmatprep.subr.mxu0 0.0
    %776 = vmatpush1.msra.mxu0 0.0
    %777 = vmatprep.subr.mxu0 0.0
    %778 = vmatpush1.msra.mxu0 0.0
    %779 = vmatprep.subr.mxu0 0.0
    %780 = vmatpush1.msra.mxu0 0.0
    %781 = vmatprep.subr.mxu0 0.0
    %782 = vmatpush1.msra.mxu0 0.0
    %783 = vmatprep.subr.mxu0 0.0
    %784 = vmatpush1.msra.mxu0 0.0
    %785 = vmatprep.subr.mxu0 0.0
    %786 = vmatpush1.msra.mxu0 0.0
    %787 = vmatprep.subr.mxu0 0.0
    %788 = vmatpush1.msra.mxu0 0.0
    %789 = vmatprep.mubr.f32.mxu0 0.0
    %790 = vmatmul.mubr.f32.gmra.mrb[0].mxu0 %v716
    %v791 = vpop.f32.mrb[0].mxu0
    %v792 = vadd.f32 %v712, %v791
    %v793 = vpop.f32.mrb[0].mxu0
    %794 = vmatprep.mubr.f32.mxu0 0.0
    %795 = vmatmul.mubr.f32.gmra.mrb[0].mxu0 %v719
    %v796 = vpop.f32.mrb[0].mxu0
    %v797 = vadd.f32 %v712, %v796
    %v798 = vpop.f32.mrb[0].mxu0
    %799 = vdwg.mxu0
    %v800 = vmax.f32 %v792, 0.0
    %v801 = vmax.f32 %v797, 0.0
    %v802 = vld [vmem:[#allocation2] sm:$0xff]
    %v803 = vld [vmem:[#allocation2 + $0x8] sm:$0xff]
    %v804 = vld [vmem:[#allocation2 + $0x10] sm:$0xff]
    %v805 = vld [vmem:[#allocation2 + $0x18] sm:$0xff]
    %v806 = vld [vmem:[#allocation2 + $0x20] sm:$0xff]
    %v807 = vld [vmem:[#allocation2 + $0x28] sm:$0xff]
    %v808 = vld [vmem:[#allocation2 + $0x30] sm:$0xff]
    %v809 = vld [vmem:[#allocation2 + $0x38] sm:$0xff]
    %v810 = vld [vmem:[#allocation2 + $0x40] sm:$0xff]
    %v811 = vld [vmem:[#allocation2 + $0x48] sm:$0xff]
    %v812 = vld [vmem:[#allocation2 + $0x50] sm:$0xff]
    %v813 = vld [vmem:[#allocation2 + $0x58] sm:$0xff]
    %v814 = vld [vmem:[#allocation2 + $0x60] sm:$0xff]
    %v815 = vld [vmem:[#allocation2 + $0x68] sm:$0xff]
    %v816 = vld [vmem:[#allocation2 + $0x70] sm:$0xff]
    %v817 = vld [vmem:[#allocation2 + $0x78] sm:$0xff]
    %v818 = vld [vmem:[%s13] sm:$0x1]
    %819 = vmatprep.subr.mxu0 0.0
    %820 = vmatpush1.msra.mxu0 %v800
    %821 = vmatprep.subr.mxu0 0.0
    %822 = vmatpush1.msra.mxu0 %v801
    %823 = vmatprep.subr.mxu0 0.0
    %824 = vmatpush1.msra.mxu0 0.0
    %825 = vmatprep.subr.mxu0 0.0
    %826 = vmatpush1.msra.mxu0 0.0
    %827 = vmatprep.subr.mxu0 0.0
    %828 = vmatpush1.msra.mxu0 0.0
    %829 = vmatprep.subr.mxu0 0.0
    %830 = vmatpush1.msra.mxu0 0.0
    %831 = vmatprep.subr.mxu0 0.0
    %832 = vmatpush1.msra.mxu0 0.0
    %833 = vmatprep.subr.mxu0 0.0
    %834 = vmatpush1.msra.mxu0 0.0
    %835 = vmatprep.subr.mxu0 0.0
    %836 = vmatpush1.msra.mxu0 0.0
    %837 = vmatprep.subr.mxu0 0.0
    %838 = vmatpush1.msra.mxu0 0.0
    %839 = vmatprep.subr.mxu0 0.0
    %840 = vmatpush1.msra.mxu0 0.0
    %841 = vmatprep.subr.mxu0 0.0
    %842 = vmatpush1.msra.mxu0 0.0
    %843 = vmatprep.subr.mxu0 0.0
    %844 = vmatpush1.msra.mxu0 0.0
    %845 = vmatprep.subr.mxu0 0.0
    %846 = vmatpush1.msra.mxu0 0.0
    %847 = vmatprep.subr.mxu0 0.0
    %848 = vmatpush1.msra.mxu0 0.0
    %849 = vmatprep.subr.mxu0 0.0
    %850 = vmatpush1.msra.mxu0 0.0
    %851 = vmatprep.subr.mxu0 0.0
    %852 = vmatpush1.msra.mxu0 0.0
    %853 = vmatprep.subr.mxu0 0.0
    %854 = vmatpush1.msra.mxu0 0.0
    %855 = vmatprep.subr.mxu0 0.0
    %856 = vmatpush1.msra.mxu0 0.0
    %857 = vmatprep.subr.mxu0 0.0
    %858 = vmatpush1.msra.mxu0 0.0
    %859 = vmatprep.subr.mxu0 0.0
    %860 = vmatpush1.msra.mxu0 0.0
    %861 = vmatprep.subr.mxu0 0.0
    %862 = vmatpush1.msra.mxu0 0.0
    %863 = vmatprep.subr.mxu0 0.0
    %864 = vmatpush1.msra.mxu0 0.0
    %865 = vmatprep.subr.mxu0 0.0
    %866 = vmatpush1.msra.mxu0 0.0
    %867 = vmatprep.subr.mxu0 0.0
    %868 = vmatpush1.msra.mxu0 0.0
    %869 = vmatprep.subr.mxu0 0.0
    %870 = vmatpush1.msra.mxu0 0.0
    %871 = vmatprep.subr.mxu0 0.0
    %872 = vmatpush1.msra.mxu0 0.0
    %873 = vmatprep.subr.mxu0 0.0
    %874 = vmatpush1.msra.mxu0 0.0
    %875 = vmatprep.subr.mxu0 0.0
    %876 = vmatpush1.msra.mxu0 0.0
    %877 = vmatprep.subr.mxu0 0.0
    %878 = vmatpush1.msra.mxu0 0.0
    %879 = vmatprep.subr.mxu0 0.0
    %880 = vmatpush1.msra.mxu0 0.0
    %881 = vmatprep.subr.mxu0 0.0
    %882 = vmatpush1.msra.mxu0 0.0
    %883 = vmatprep.mubr.f32.mxu0 0.0
    %884 = vmatmul.mubr.f32.gmra.mrb[0].mxu0 %v628
    %v885 = vpop.f32.mrb[0].mxu0
    %v886 = vadd.f32 0.0, %v885
    %v887 = vpop.f32.mrb[0].mxu0
    %888 = vmatprep.mubr.f32.mxu0 0.0
    %889 = vmatmul.mubr.f32.gmra.mrb[0].mxu0 %v631
    %v890 = vpop.f32.mrb[0].mxu0
    %v891 = vadd.f32 0.0, %v890
    %v892 = vpop.f32.mrb[0].mxu0
    %893 = vdwg.mxu0
    %v895 = vlaneseq
    %v896 = vshrl.u32 %v895, 7
    %v897 = vsub.s32 0, %v896
    %v898 = vrot.slane %v818, %v897
    %900 = vmatprep.subr.mxu0 0.0
    %901 = vmatpush1.msra.mxu0 %v802
    %902 = vmatprep.subr.mxu0 0.0
    %903 = vmatpush1.msra.mxu0 %v803
    %904 = vmatprep.subr.mxu0 0.0
    %905 = vmatpush1.msra.mxu0 %v804
    %906 = vmatprep.subr.mxu0 0.0
    %907 = vmatpush1.msra.mxu0 %v805
    %908 = vmatprep.subr.mxu0 0.0
    %909 = vmatpush1.msra.mxu0 %v806
    %910 = vmatprep.subr.mxu0 0.0
    %911 = vmatpush1.msra.mxu0 %v807
    %912 = vmatprep.subr.mxu0 0.0
    %913 = vmatpush1.msra.mxu0 %v808
    %914 = vmatprep.subr.mxu0 0.0
    %915 = vmatpush1.msra.mxu0 %v809
    %916 = vmatprep.subr.mxu0 0.0
    %917 = vmatpush1.msra.mxu0 %v810
    %918 = vmatprep.subr.mxu0 0.0
    %919 = vmatpush1.msra.mxu0 %v811
    %920 = vmatprep.subr.mxu0 0.0
    %921 = vmatpush1.msra.mxu0 %v812
    %922 = vmatprep.subr.mxu0 0.0
    %923 = vmatpush1.msra.mxu0 %v813
    %924 = vmatprep.subr.mxu0 0.0
    %925 = vmatpush1.msra.mxu0 %v814
    %926 = vmatprep.subr.mxu0 0.0
    %927 = vmatpush1.msra.mxu0 %v815
    %928 = vmatprep.subr.mxu0 0.0
    %929 = vmatpush1.msra.mxu0 %v816
    %930 = vmatprep.subr.mxu0 0.0
    %931 = vmatpush1.msra.mxu0 %v817
    %932 = vmatprep.subr.mxu0 0.0
    %933 = vmatpush1.msra.mxu0 0.0
    %934 = vmatprep.subr.mxu0 0.0
    %935 = vmatpush1.msra.mxu0 0.0
    %936 = vmatprep.subr.mxu0 0.0
    %937 = vmatpush1.msra.mxu0 0.0
    %938 = vmatprep.subr.mxu0 0.0
    %939 = vmatpush1.msra.mxu0 0.0
    %940 = vmatprep.subr.mxu0 0.0
    %941 = vmatpush1.msra.mxu0 0.0
    %942 = vmatprep.subr.mxu0 0.0
    %943 = vmatpush1.msra.mxu0 0.0
    %944 = vmatprep.subr.mxu0 0.0
    %945 = vmatpush1.msra.mxu0 0.0
    %946 = vmatprep.subr.mxu0 0.0
    %947 = vmatpush1.msra.mxu0 0.0
    %948 = vmatprep.subr.mxu0 0.0
    %949 = vmatpush1.msra.mxu0 0.0
    %950 = vmatprep.subr.mxu0 0.0
    %951 = vmatpush1.msra.mxu0 0.0
    %952 = vmatprep.subr.mxu0 0.0
    %953 = vmatpush1.msra.mxu0 0.0
    %954 = vmatprep.subr.mxu0 0.0
    %955 = vmatpush1.msra.mxu0 0.0
    %956 = vmatprep.subr.mxu0 0.0
    %957 = vmatpush1.msra.mxu0 0.0
    %958 = vmatprep.subr.mxu0 0.0
    %959 = vmatpush1.msra.mxu0 0.0
    %960 = vmatprep.subr.mxu0 0.0
    %961 = vmatpush1.msra.mxu0 0.0
    %962 = vmatprep.subr.mxu0 0.0
    %963 = vmatpush1.msra.mxu0 0.0
    %964 = vmatprep.mubr.f32.mxu0 0.0
    %965 = vmatmul.mubr.f32.gmra.mrb[0].mxu0 %v886
    %v966 = vpop.f32.mrb[0].mxu0
    %v967 = vadd.f32 %v898, %v966
    %v968 = vpop.f32.mrb[0].mxu0
    %969 = vmatprep.mubr.f32.mxu0 0.0
    %970 = vmatmul.mubr.f32.gmra.mrb[0].mxu0 %v891
    %v971 = vpop.f32.mrb[0].mxu0
    %v972 = vadd.f32 %v898, %v971
    %v973 = vpop.f32.mrb[0].mxu0
    %974 = vdwg.mxu0
    %v975 = vmax.f32 %v967, 0.0
    %v976 = vmax.f32 %v972, 0.0
    %977 = vst [vmem:[#allocation6] sm:$0xff] %v975
    %978 = vst [vmem:[#allocation6 + $0x8] sm:$0xff] %v976
    // Predicated region
    $region62: #{tpu_custom_call.1} parent=1 // pred_check
      _
    $region63: #{tpu_custom_call.1} parent=1 // pred_check_branch
      %980 = sbr.rel (0) target = $region65
    $region64: #{tpu_custom_call.1} parent=1 // pred_region
      %s982 = ssub.s32 256, 256
      %983 = vsyncadd [#allocation4], %s982
      %s984 = sshll.u32 [#allocation5], 4
      %s985 = int_to_ptr.vmem [resolvable:$true] %s984
      %990 = dma.vmem_to_hbm [thread:$0]  %s985, 256, %s14, [#allocation4], 128, 128, 8
    $region65: #{tpu_custom_call.1} parent=1 // pred_fallthru
      _
    // Predicated region
    $region66: #{tpu_custom_call.1} parent=1 // pred_check
      _
    $region67: #{tpu_custom_call.1} parent=1 // pred_check_branch
      %992 = sbr.rel (0) target = $region69
    $region68: #{tpu_custom_call.1} parent=1 // pred_region
      %s994 = ssub.s32 256, 256
      %995 = vsyncadd [#allocation7], %s994
      %s996 = sshll.u32 [#allocation6], 4
      %s997 = int_to_ptr.vmem [resolvable:$true] %s996
      %1002 = dma.vmem_to_hbm [thread:$0]  %s997, 256, %s15, [#allocation7], 128, 128, 8
    $region69: #{tpu_custom_call.1} parent=1 // pred_fallthru
      _
    // Predicated region
    $region70: #{tpu_custom_call.1} parent=1 // pred_check
      _
    $region71: #{tpu_custom_call.1} parent=1 // pred_check_branch
      %1004 = sbr.rel (0) target = $region73
    $region72: #{tpu_custom_call.1} parent=1 // pred_region
      _
    $region73: #{tpu_custom_call.1} parent=1 // pred_fallthru
      _
    // Predicated region
    $region74: #{tpu_custom_call.1} parent=1 // pred_check
      _
    $region75: #{tpu_custom_call.1} parent=1 // pred_check_branch
      %1006 = sbr.rel (0) target = $region77
    $region76: #{tpu_custom_call.1} parent=1 // pred_region
      %1007 = dma.done [#allocation4], 256
    $region77: #{tpu_custom_call.1} parent=1 // pred_fallthru
      _
    // Predicated region
    $region78: #{tpu_custom_call.1} parent=1 // pred_check
      _
    $region79: #{tpu_custom_call.1} parent=1 // pred_check_branch
      %1009 = sbr.rel (0) target = $region81
    $region80: #{tpu_custom_call.1} parent=1 // pred_region
      %1010 = dma.done [#allocation7], 256
    $region81: #{tpu_custom_call.1} parent=1 // pred_fallthru
      _
    // Predicated region
    $region82: #{tpu_custom_call.1} parent=1 // pred_check
      _
    $region83: #{tpu_custom_call.1} parent=1 // pred_check_branch
      %1012 = sbr.rel (0) target = $region85
    $region84: #{tpu_custom_call.1} parent=1 // pred_region
      _
    $region85: #{tpu_custom_call.1} parent=1 // pred_fallthru
      _
    %1013 = vsyncpa [#allocation3], 1
    %1014 = vsyncpa [#allocation4], 1
    %1015 = vsyncpa [#allocation7], 1

</llo_original>
